<compile_context>
chip_gen: v7x
topology: tpu7x:2x2x1
jax: 0.10.0
libtpu: 0.0.40
codegen_flags: <defaults>
</compile_context>

<pallas_src>
import functools

import jax
import jax.numpy as jnp
from jax.experimental import pallas as pl
from jax.experimental.pallas import tpu as pltpu


def _round_up(x: int, m: int) -> int:
    return ((x + m - 1) // m) * m


# ---------------------------------------------------------------------------
# Path 1: VMEM-resident table, gather via one-hot matmul on the MXU (bf16).
# ---------------------------------------------------------------------------
def _embed_onehot_kernel(ids_ref, table_ref, out_ref):
    # ids_ref  : (T, 1) int32   (VMEM block)
    # table_ref: (V, D) bf16    (whole table, single copy resident in VMEM)
    # out_ref  : (T, D) bf16
    T = out_ref.shape[0]
    V = table_ref.shape[0]
    ids = jnp.clip(ids_ref[...], 0, V - 1)                          # (T, 1)
    onehot = (ids == jax.lax.broadcasted_iota(jnp.int32, (T, V), 1))
    onehot = onehot.astype(table_ref.dtype)                         # exact 0/1
    acc = jnp.dot(onehot, table_ref[...],
                  preferred_element_type=jnp.float32)               # exact select
    out_ref[...] = acc.astype(out_ref.dtype)


# ---------------------------------------------------------------------------
# Path 2: VMEM-resident table, batched row gather with dense sublane stores.
# ---------------------------------------------------------------------------
def _embed_rows_kernel(ids_ref, table_ref, out_ref, *, rows_per_group):
    # ids_ref  : (1, T) int32   (SMEM block -> cheap scalar reads)
    # table_ref: (V, D)         (whole table, single copy resident in VMEM)
    # out_ref  : (T, D)
    T, D = out_ref.shape
    V = table_ref.shape[0]
    G = rows_per_group
    # Hoisted once (JAX does not CSE broadcast_in_dim inside loops).
    row_iota = jax.lax.broadcasted_iota(jnp.int32, (G, D), 0)

    @pl.loop(0, T // G)
    def _(g):
        base = pl.multiple_of(g * G, G)
        group = jnp.zeros((G, D), out_ref.dtype)
        for j in range(G):                               # static unroll in-group
            tok = jnp.clip(ids_ref[0, base + j], 0, V - 1)
            row = table_ref[pl.ds(tok, 1), :]            # (1, D) dynamic-row load
            group = jnp.where(row_iota == j, row, group)  # assemble in registers
        out_ref[pl.ds(base, G), :] = group               # one dense (G, D) store


# ---------------------------------------------------------------------------
# Path 3: table in HBM, per-row DMA gather straight into the output tile.
# ---------------------------------------------------------------------------
def _embed_hbm_kernel(ids_ref, table_hbm, out_ref, sems, *, sem_pool):
    # ids_ref  : (1, T) int32   (SMEM block)
    # table_hbm: (V, D) raw HBM ref
    # out_ref  : (T, D) VMEM output tile (DMA destination, no staging buffer)
    # sems     : (sem_pool,) DMA semaphores, reused round-robin
    T = out_ref.shape[0]
    V = table_hbm.shape[0]
    P = sem_pool

    def row_dma(t):
        tok = jnp.clip(ids_ref[0, t], 0, V - 1)
        return pltpu.make_async_copy(
            table_hbm.at[pl.ds(tok, 1), :],
            out_ref.at[pl.ds(t, 1), :],
            sems.at[t % P],
        )

    @pl.loop(0, T)
    def _(t):
        @pl.when(t >= P)
        def _():
            row_dma(t - P).wait()          # free sem slot (t % P) before reuse
        row_dma(t).start()

    @pl.loop(max(T - P, 0), T)
    def _(t):
        row_dma(t).wait()                  # drain the last <=P in-flight gathers


# ---------------------------------------------------------------------------
# Wrapper: TokenEmbedding.forward
# ---------------------------------------------------------------------------
def token_embedding(input_ids, emb_table, *, force_hbm_gather=False):
    """Equivalent of TokenEmbedding.forward: (B, S) int -> (B, S, D) float.

    Out-of-range ids are clamped to [0, V-1] (nn.Embedding would raise).
    """
    B, S = input_ids.shape
    V, D = emb_table.shape
    dtype = emb_table.dtype
    itemsize = jnp.dtype(dtype).itemsize

    ids = input_ids.reshape(-1).astype(jnp.int32)
    N = ids.shape[0]

    # Tokens per grid step: full sublane groups (8 rows f32 / 16 rows bf16),
    # sized so each output tile is ~512 KiB (amortizes per-step overhead and
    # gives large, unmasked writeback DMAs).
    sub = 8 * max(1, 4 // itemsize)
    T = max(sub, min(1024, (512 * 1024) // max(1, D * itemsize)))
    T = min(_round_up(T, sub), _round_up(N, sub))

    vmem_cap = 64 * 1024 * 1024                  # conservative v7x per-core floor
    try:
        vmem_cap = int(pltpu.get_tpu_info().vmem_capacity_bytes)
    except Exception:
        pass
    budget = (vmem_cap * 7) // 8

    table_bytes = V * D * itemsize

    def _tile_bytes(t):
        return t * D * itemsize

    def _need_rows(t):       # 1x table + double-buffered out tile + slack
        return table_bytes + 2 * _tile_bytes(t) + (4 << 20)

    def _need_onehot(t):     # + one-hot / iota intermediates, f32 acc, VMEM ids
        return _need_rows(t) + t * V * (itemsize + 4) + t * D * 4 + 2 * t * 512

    strategy = "hbm"
    if not force_hbm_gather:
        if dtype == jnp.bfloat16 and V <= 4096:
            while _need_onehot(T) > budget and T > sub:
                T = max(sub, _round_up(T // 2, sub))
            if _need_onehot(T) <= budget:
                strategy = "onehot"
        if strategy == "hbm":
            while _need_rows(T) > budget and T > sub:
                T = max(sub, _round_up(T // 2, sub))
            if _need_rows(T) <= budget:
                strategy = "rows"

    N_pad = _round_up(N, T)
    ids_pad = jnp.pad(ids, (0, N_pad - N))       # padded ids gather row 0, sliced off
    n_tiles = N_pad // T

    if strategy == "onehot":
        vmem_limit = int(min(max(_need_onehot(T) + (4 << 20), 32 << 20), budget))
        out_flat = pl.pallas_call(
            _embed_onehot_kernel,
            out_shape=jax.ShapeDtypeStruct((N_pad, D), dtype),
            grid=(n_tiles,),
            in_specs=[
                pl.BlockSpec((T, 1), lambda i: (i, 0)),
                # Whole table placed once in VMEM (not double-buffered).
                pl.BlockSpec(memory_space=pltpu.MemorySpace.VMEM),
            ],
            out_specs=pl.BlockSpec((T, D), lambda i: (i, 0)),
            compiler_params=pltpu.CompilerParams(
                dimension_semantics=("parallel",),
                vmem_limit_bytes=vmem_limit,
            ),
        )(ids_pad.reshape(N_pad, 1), emb_table)

    elif strategy == "rows":
        vmem_limit = int(min(max(_need_rows(T) + (4 << 20), 32 << 20), budget))
        out_flat = pl.pallas_call(
            functools.partial(_embed_rows_kernel, rows_per_group=sub),
            out_shape=jax.ShapeDtypeStruct((N_pad, D), dtype),
            grid=(n_tiles,),
            in_specs=[
                pl.BlockSpec((1, T), lambda i: (i, 0),
                             memory_space=pltpu.MemorySpace.SMEM),
                pl.BlockSpec(memory_space=pltpu.MemorySpace.VMEM),
            ],
            out_specs=pl.BlockSpec((T, D), lambda i: (i, 0)),
            compiler_params=pltpu.CompilerParams(
                dimension_semantics=("parallel",),
                vmem_limit_bytes=vmem_limit,
            ),
        )(ids_pad.reshape(n_tiles, T), emb_table)

    else:  # "hbm"
        sem_pool = min(8, T)
        vmem_limit = int(min(max(2 * _tile_bytes(T) + (4 << 20), 16 << 20), budget))
        out_flat = pl.pallas_call(
            functools.partial(_embed_hbm_kernel, sem_pool=sem_pool),
            out_shape=jax.ShapeDtypeStruct((N_pad, D), dtype),
            grid=(n_tiles,),
            in_specs=[
                pl.BlockSpec((1, T), lambda i: (i, 0),
                             memory_space=pltpu.MemorySpace.SMEM),
                pl.BlockSpec(memory_space=pl.ANY),       # raw HBM table
            ],
            out_specs=pl.BlockSpec((T, D), lambda i: (i, 0)),
            scratch_shapes=[pltpu.SemaphoreType.DMA((sem_pool,))],
            compiler_params=pltpu.CompilerParams(
                dimension_semantics=("parallel",),
                vmem_limit_bytes=vmem_limit,
            ),
        )(ids_pad.reshape(n_tiles, T), emb_table)

    return out_flat[:N].reshape(B, S, D)


if __name__ == "__main__":
    vocab_size = 64
    embedding_dim = 128
    B, S = 2, 8

    key = jax.random.PRNGKey(0)
    k_w, k_ids = jax.random.split(key)

    # nn.Embedding default init: weight ~ N(0, 1)
    emb_table = jax.random.normal(k_w, (vocab_size, embedding_dim), dtype=jnp.float32)
    input_ids = jax.random.randint(k_ids, (B, S), 0, vocab_size, dtype=jnp.int32)

    ref = jnp.take(emb_table, input_ids, axis=0)

    # f32 table -> VMEM-resident "rows" path (batched sublane-group gather).
    out = jax.block_until_ready(token_embedding(input_ids, emb_table))
    assert out.shape == (B, S, embedding_dim), out.shape
    assert jnp.allclose(out, ref), "f32 VMEM rows path mismatch vs reference"

    # Forced HBM DMA-gather path (used for tables too large for VMEM).
    out_hbm = jax.block_until_ready(
        token_embedding(input_ids, emb_table, force_hbm_gather=True))
    assert jnp.allclose(out_hbm, ref), "f32 HBM DMA-gather path mismatch"

    # bf16 table -> one-hot MXU matmul path (16-row sublane tiling) + HBM path.
    emb_bf16 = emb_table.astype(jnp.bfloat16)
    ref_bf16 = jnp.take(emb_bf16, input_ids, axis=0)
    out_bf16 = jax.block_until_ready(token_embedding(input_ids, emb_bf16))
    assert jnp.allclose(out_bf16, ref_bf16), "bf16 one-hot MXU path mismatch"
    out_bf16_hbm = jax.block_until_ready(
        token_embedding(input_ids, emb_bf16, force_hbm_gather=True))
    assert jnp.allclose(out_bf16_hbm, ref_bf16), "bf16 HBM DMA-gather path mismatch"

    print("KERNEL_OK")
</pallas_src>

<mosaic_0001>
module attributes {stable_mosaic.version = 11 : i64} {
  func.func @_embed_rows_kernel(%arg0: i32, %arg1: memref<1x16xi32, #tpu.memory_space<smem>>, %arg2: memref<64x128xf32, #tpu.memory_space<vmem>>, %arg3: memref<16x128xf32, #tpu.memory_space<vmem>>) attributes {dimension_semantics = [#tpu.dimension_semantics<parallel>], iteration_bounds = array<i64: 1>, scalar_prefetch = 0 : i64, scratch_operands = 0 : i64, tpu.core_type = #tpu.core_type<tc>, window_params = [{transform_indices = @transform_0, window_bounds = array<i64: 1, 16>}, {pipeline_mode = #tpu.pipeline_mode<synchronous>, transform_indices = @transform_1, window_bounds = array<i64: 64, 128>}, {transform_indices = @transform_2, window_bounds = array<i64: 16, 128>}]} {
    %0 = tpu.iota {dimensions = array<i32: 0>} : vector<8x128xi32>
    %c0_i32 = arith.constant 0 : i32
    %c2_i32 = arith.constant 2 : i32
    %1 = arith.addi %c0_i32, %c2_i32 : i32
    %c1_i32 = arith.constant 1 : i32
    scf.for %arg4 = %c0_i32 to %1 step %c1_i32  : i32 {
      %c1_i32_1 = arith.constant 1 : i32
      %2 = arith.muli %arg4, %c1_i32_1 : i32
      %c0_i32_2 = arith.constant 0 : i32
      %3 = arith.addi %c0_i32_2, %2 : i32
      %c8_i32 = arith.constant 8 : i32
      %4 = arith.muli %3, %c8_i32 : i32
      %5 = tpu.assume_multiple %4, 8 : i32
      %cst = arith.constant 0.000000e+00 : f32
      %6 = vector.broadcast %cst : f32 to vector<8x128xf32>
      %c0_i32_3 = arith.constant 0 : i32
      %7 = arith.addi %5, %c0_i32_3 : i32
      %c0 = arith.constant 0 : index
      %8 = arith.index_cast %7 : i32 to index
      %9 = memref.load %arg1[%c0, %8] : memref<1x16xi32, #tpu.memory_space<smem>>
      %c0_i32_4 = arith.constant 0 : i32
      %c63_i32 = arith.constant 63 : i32
      %10 = arith.maxsi %c0_i32_4, %9 : i32
      %11 = arith.minsi %c63_i32, %10 : i32
      %12 = arith.index_cast %11 : i32 to index
      %c0_5 = arith.constant 0 : index
      %13 = vector.load %arg2[%12, %c0_5] : memref<64x128xf32, #tpu.memory_space<vmem>>, vector<1x128xf32>
      %c0_i32_6 = arith.constant 0 : i32
      %14 = vector.broadcast %c0_i32_6 : i32 to vector<8x128xi32>
      %15 = arith.cmpi eq, %0, %14 : vector<8x128xi32>
      %16 = vector.shape_cast %13 : vector<1x128xf32> to vector<1x128xf32>
      %17 = vector.broadcast %16 : vector<1x128xf32> to vector<8x128xf32>
      %18 = arith.select %15, %17, %6 : vector<8x128xi1>, vector<8x128xf32>
      %c1_i32_7 = arith.constant 1 : i32
      %19 = arith.addi %5, %c1_i32_7 : i32
      %c0_8 = arith.constant 0 : index
      %20 = arith.index_cast %19 : i32 to index
      %21 = memref.load %arg1[%c0_8, %20] : memref<1x16xi32, #tpu.memory_space<smem>>
      %c0_i32_9 = arith.constant 0 : i32
      %c63_i32_10 = arith.constant 63 : i32
      %22 = arith.maxsi %c0_i32_9, %21 : i32
      %23 = arith.minsi %c63_i32_10, %22 : i32
      %24 = arith.index_cast %23 : i32 to index
      %c0_11 = arith.constant 0 : index
      %25 = vector.load %arg2[%24, %c0_11] : memref<64x128xf32, #tpu.memory_space<vmem>>, vector<1x128xf32>
      %c1_i32_12 = arith.constant 1 : i32
      %26 = vector.broadcast %c1_i32_12 : i32 to vector<8x128xi32>
      %27 = arith.cmpi eq, %0, %26 : vector<8x128xi32>
      %28 = vector.shape_cast %25 : vector<1x128xf32> to vector<1x128xf32>
      %29 = vector.broadcast %28 : vector<1x128xf32> to vector<8x128xf32>
      %30 = arith.select %27, %29, %18 : vector<8x128xi1>, vector<8x128xf32>
      %c2_i32_13 = arith.constant 2 : i32
      %31 = arith.addi %5, %c2_i32_13 : i32
      %c0_14 = arith.constant 0 : index
      %32 = arith.index_cast %31 : i32 to index
      %33 = memref.load %arg1[%c0_14, %32] : memref<1x16xi32, #tpu.memory_space<smem>>
      %c0_i32_15 = arith.constant 0 : i32
      %c63_i32_16 = arith.constant 63 : i32
      %34 = arith.maxsi %c0_i32_15, %33 : i32
      %35 = arith.minsi %c63_i32_16, %34 : i32
      %36 = arith.index_cast %35 : i32 to index
      %c0_17 = arith.constant 0 : index
      %37 = vector.load %arg2[%36, %c0_17] : memref<64x128xf32, #tpu.memory_space<vmem>>, vector<1x128xf32>
      %c2_i32_18 = arith.constant 2 : i32
      %38 = vector.broadcast %c2_i32_18 : i32 to vector<8x128xi32>
      %39 = arith.cmpi eq, %0, %38 : vector<8x128xi32>
      %40 = vector.shape_cast %37 : vector<1x128xf32> to vector<1x128xf32>
      %41 = vector.broadcast %40 : vector<1x128xf32> to vector<8x128xf32>
      %42 = arith.select %39, %41, %30 : vector<8x128xi1>, vector<8x128xf32>
      %c3_i32 = arith.constant 3 : i32
      %43 = arith.addi %5, %c3_i32 : i32
      %c0_19 = arith.constant 0 : index
      %44 = arith.index_cast %43 : i32 to index
      %45 = memref.load %arg1[%c0_19, %44] : memref<1x16xi32, #tpu.memory_space<smem>>
      %c0_i32_20 = arith.constant 0 : i32
      %c63_i32_21 = arith.constant 63 : i32
      %46 = arith.maxsi %c0_i32_20, %45 : i32
      %47 = arith.minsi %c63_i32_21, %46 : i32
      %48 = arith.index_cast %47 : i32 to index
      %c0_22 = arith.constant 0 : index
      %49 = vector.load %arg2[%48, %c0_22] : memref<64x128xf32, #tpu.memory_space<vmem>>, vector<1x128xf32>
      %c3_i32_23 = arith.constant 3 : i32
      %50 = vector.broadcast %c3_i32_23 : i32 to vector<8x128xi32>
      %51 = arith.cmpi eq, %0, %50 : vector<8x128xi32>
      %52 = vector.shape_cast %49 : vector<1x128xf32> to vector<1x128xf32>
      %53 = vector.broadcast %52 : vector<1x128xf32> to vector<8x128xf32>
      %54 = arith.select %51, %53, %42 : vector<8x128xi1>, vector<8x128xf32>
      %c4_i32 = arith.constant 4 : i32
      %55 = arith.addi %5, %c4_i32 : i32
      %c0_24 = arith.constant 0 : index
      %56 = arith.index_cast %55 : i32 to index
      %57 = memref.load %arg1[%c0_24, %56] : memref<1x16xi32, #tpu.memory_space<smem>>
      %c0_i32_25 = arith.constant 0 : i32
      %c63_i32_26 = arith.constant 63 : i32
      %58 = arith.maxsi %c0_i32_25, %57 : i32
      %59 = arith.minsi %c63_i32_26, %58 : i32
      %60 = arith.index_cast %59 : i32 to index
      %c0_27 = arith.constant 0 : index
      %61 = vector.load %arg2[%60, %c0_27] : memref<64x128xf32, #tpu.memory_space<vmem>>, vector<1x128xf32>
      %c4_i32_28 = arith.constant 4 : i32
      %62 = vector.broadcast %c4_i32_28 : i32 to vector<8x128xi32>
      %63 = arith.cmpi eq, %0, %62 : vector<8x128xi32>
      %64 = vector.shape_cast %61 : vector<1x128xf32> to vector<1x128xf32>
      %65 = vector.broadcast %64 : vector<1x128xf32> to vector<8x128xf32>
      %66 = arith.select %63, %65, %54 : vector<8x128xi1>, vector<8x128xf32>
      %c5_i32 = arith.constant 5 : i32
      %67 = arith.addi %5, %c5_i32 : i32
      %c0_29 = arith.constant 0 : index
      %68 = arith.index_cast %67 : i32 to index
      %69 = memref.load %arg1[%c0_29, %68] : memref<1x16xi32, #tpu.memory_space<smem>>
      %c0_i32_30 = arith.constant 0 : i32
      %c63_i32_31 = arith.constant 63 : i32
      %70 = arith.maxsi %c0_i32_30, %69 : i32
      %71 = arith.minsi %c63_i32_31, %70 : i32
      %72 = arith.index_cast %71 : i32 to index
      %c0_32 = arith.constant 0 : index
      %73 = vector.load %arg2[%72, %c0_32] : memref<64x128xf32, #tpu.memory_space<vmem>>, vector<1x128xf32>
      %c5_i32_33 = arith.constant 5 : i32
      %74 = vector.broadcast %c5_i32_33 : i32 to vector<8x128xi32>
      %75 = arith.cmpi eq, %0, %74 : vector<8x128xi32>
      %76 = vector.shape_cast %73 : vector<1x128xf32> to vector<1x128xf32>
      %77 = vector.broadcast %76 : vector<1x128xf32> to vector<8x128xf32>
      %78 = arith.select %75, %77, %66 : vector<8x128xi1>, vector<8x128xf32>
      %c6_i32 = arith.constant 6 : i32
      %79 = arith.addi %5, %c6_i32 : i32
      %c0_34 = arith.constant 0 : index
      %80 = arith.index_cast %79 : i32 to index
      %81 = memref.load %arg1[%c0_34, %80] : memref<1x16xi32, #tpu.memory_space<smem>>
      %c0_i32_35 = arith.constant 0 : i32
      %c63_i32_36 = arith.constant 63 : i32
      %82 = arith.maxsi %c0_i32_35, %81 : i32
      %83 = arith.minsi %c63_i32_36, %82 : i32
      %84 = arith.index_cast %83 : i32 to index
      %c0_37 = arith.constant 0 : index
      %85 = vector.load %arg2[%84, %c0_37] : memref<64x128xf32, #tpu.memory_space<vmem>>, vector<1x128xf32>
      %c6_i32_38 = arith.constant 6 : i32
      %86 = vector.broadcast %c6_i32_38 : i32 to vector<8x128xi32>
      %87 = arith.cmpi eq, %0, %86 : vector<8x128xi32>
      %88 = vector.shape_cast %85 : vector<1x128xf32> to vector<1x128xf32>
      %89 = vector.broadcast %88 : vector<1x128xf32> to vector<8x128xf32>
      %90 = arith.select %87, %89, %78 : vector<8x128xi1>, vector<8x128xf32>
      %c7_i32 = arith.constant 7 : i32
      %91 = arith.addi %5, %c7_i32 : i32
      %c0_39 = arith.constant 0 : index
      %92 = arith.index_cast %91 : i32 to index
      %93 = memref.load %arg1[%c0_39, %92] : memref<1x16xi32, #tpu.memory_space<smem>>
      %c0_i32_40 = arith.constant 0 : i32
      %c63_i32_41 = arith.constant 63 : i32
      %94 = arith.maxsi %c0_i32_40, %93 : i32
      %95 = arith.minsi %c63_i32_41, %94 : i32
      %96 = arith.index_cast %95 : i32 to index
      %c0_42 = arith.constant 0 : index
      %97 = vector.load %arg2[%96, %c0_42] : memref<64x128xf32, #tpu.memory_space<vmem>>, vector<1x128xf32>
      %c7_i32_43 = arith.constant 7 : i32
      %98 = vector.broadcast %c7_i32_43 : i32 to vector<8x128xi32>
      %99 = arith.cmpi eq, %0, %98 : vector<8x128xi32>
      %100 = vector.shape_cast %97 : vector<1x128xf32> to vector<1x128xf32>
      %101 = vector.broadcast %100 : vector<1x128xf32> to vector<8x128xf32>
      %102 = arith.select %99, %101, %90 : vector<8x128xi1>, vector<8x128xf32>
      %103 = arith.index_cast %5 : i32 to index
      %c0_44 = arith.constant 0 : index
      %104 = vector.load %arg3[%103, %c0_44] : memref<16x128xf32, #tpu.memory_space<vmem>>, vector<8x128xf32>
      tpu.vector_store %arg3[%103, %c0_44], %102 {strides = array<i32>} : memref<16x128xf32, #tpu.memory_space<vmem>>, vector<8x128xf32>,
    }
    %c2_i32_0 = arith.constant 2 : i32
    return
  }
  func.func @transform_0(%arg0: i32) -> (i32, i32) {
    %c0_i32 = arith.constant 0 : i32
    %c0_i32_0 = arith.constant 0 : i32
    return %arg0, %c0_i32 : i32, i32
  }
  func.func @transform_1(%arg0: i32) -> (i32, i32) {
    %c0_i32 = arith.constant 0 : i32
    %c0_i32_0 = arith.constant 0 : i32
    %c0_i32_1 = arith.constant 0 : i32
    return %c0_i32, %c0_i32_0 : i32, i32
  }
  func.func @transform_2(%arg0: i32) -> (i32, i32) {
    %c0_i32 = arith.constant 0 : i32
    %c0_i32_0 = arith.constant 0 : i32
    return %arg0, %c0_i32 : i32, i32
  }
}

</mosaic_0001>

<llo_original>
// kernel: tpu_custom_call.1
$region0: #{tpu_custom_call.1}
  #allocation0 [shape = 'u32[]', space=smem, size = 0x4, offset = 0x4, fixed_abs, tag = 'smem constant byte address 0x4 - core index']
  #allocation1 [shape = 'u32[144,128]{1,0:T(1,128)}', space=vmem, size = 0x12000, scoped, tag = 'internal scratch']
  %s0 = inlined_call_operand.hbm [shape: s32[1,16], index: 0, kind: input, shape index: {}]
  %s1 = inlined_call_operand.hbm [shape: f32[64,128], index: 1, kind: input, shape index: {}]
  %s2 = inlined_call_operand.hbm [shape: f32[16,128], index: 2, kind: output, shape index: {}]
  %s3 = sld [smem:[#allocation0]]
  $region33: #{tpu_custom_call.1} parent=0
    _
  %s5 = ssub.s32 1, %s3
  %s6 = scalar_select 0, %s5, %s3
  $region1: #{tpu_custom_call.1} parent=0
    #allocation2 [shape = 'u8[512]{0}', space=smem, size = 0x200, scoped, tag = 'input window, operand 0, single buffered']
    #allocation3 [shape = 's32[1]{0}', space=sflag, size = 0x4, scoped, tag = 'scoped memory for tpu_custom_call.1']
    #allocation4 [shape = 's32[1]{0}', space=sflag, size = 0x4, scoped, tag = 'scoped memory for tpu_custom_call.1']
    #allocation5 [shape = 's32[1]{0}', space=sflag, size = 0x4, scoped, tag = 'scoped memory for tpu_custom_call.1']
    #allocation6 [shape = 'u8[32768]{0}', space=vmem, size = 0x8000, scoped, tag = 'input window, operand 1, single buffered']
    #allocation7 [shape = 'u8[8192]{0}', space=vmem, size = 0x2000, scoped, tag = 'output window, operand 0, single buffered']
    %7 = vsyncpa [#allocation5], 0
    %8 = vsyncpa [#allocation3], 0
    %9 = vsyncpa [#allocation4], 0
    // Predicated region
    $region2: #{tpu_custom_call.1} parent=1 // pred_check
      _
    $region3: #{tpu_custom_call.1} parent=1 // pred_check_branch
      %11 = sbr.rel (0) target = $region5
    $region4: #{tpu_custom_call.1} parent=1 // pred_region
      %s13 = ssub.s32 16, 16
      %14 = vsyncadd [#allocation5], %s13
      %17 = dma.hbm_to_smem %s0, 16, [#allocation2], [#allocation5]
    $region5: #{tpu_custom_call.1} parent=1 // pred_fallthru
      _
    // Predicated region
    $region6: #{tpu_custom_call.1} parent=1 // pred_check
      _
    $region7: #{tpu_custom_call.1} parent=1 // pred_check_branch
      %19 = sbr.rel (0) target = $region9
    $region8: #{tpu_custom_call.1} parent=1 // pred_region
      %s21 = ssub.s32 1024, 1024
      %22 = vsyncadd [#allocation3], %s21
      %s23 = sshll.u32 [#allocation6], 4
      %s24 = int_to_ptr.vmem [resolvable:$true] %s23
      %29 = dma.hbm_to_vmem [thread:$0]  %s1, 1024, %s24, [#allocation3], 128, 128, 8
    $region9: #{tpu_custom_call.1} parent=1 // pred_fallthru
      _
    // Predicated region
    $region10: #{tpu_custom_call.1} parent=1 // pred_check
      _
    $region11: #{tpu_custom_call.1} parent=1 // pred_check_branch
      %31 = sbr.rel (0) target = $region13
    $region12: #{tpu_custom_call.1} parent=1 // pred_region
      %32 = dma.done [#allocation5], 16
    $region13: #{tpu_custom_call.1} parent=1 // pred_fallthru
      _
    // Predicated region
    $region14: #{tpu_custom_call.1} parent=1 // pred_check
      _
    $region15: #{tpu_custom_call.1} parent=1 // pred_check_branch
      %34 = sbr.rel (0) target = $region17
    $region16: #{tpu_custom_call.1} parent=1 // pred_region
      %35 = dma.done [#allocation3], 1024
    $region17: #{tpu_custom_call.1} parent=1 // pred_fallthru
      _
    %36 = sfence
    %v37 = vlaneseq
    %v38 = vshrl.u32 %v37, 7
    loop: start=0, step=1, limit=2
    $region18: #{tpu_custom_call.1} parent=1 // loop_pre_header
      _
    $region19: #{tpu_custom_call.1} parent=1 // loop_header
      %s40 = sphi 0, %s44
      %p41 = scmp.ge.s32.totalorder %s40, 2
    $region20: #{tpu_custom_call.1} parent=1 // loop_header_branch
      %43 = sbr.rel (%p41) target = $region24
    $region21: #{tpu_custom_call.1} parent=1 // loop_body
      %s45 = smul.u32 %s40, 8
      %s46 = sld [smem:[#allocation2 + %s45]]
      %p47 = scmp.gt.s32.totalorder %s46, 0
      %s48 = scalar_select %p47, %s46, 0
      %p49 = scmp.lt.s32.totalorder %s48, 63
      %s50 = scalar_select %p49, %s48, 63
      %s51 = scalar_lea.vmem [#allocation6], %s50
      %v52 = vld [vmem:[%s51] sm:$0x1]
      %vm53 = vcmp.eq.s32.totalorder %v38, 0
      %v54 = vlaneseq
      %v55 = vshrl.u32 %v54, 7
      %v56 = vsub.s32 0, %v55
      %v57 = vrot.slane %v52, %v56
      %v58 = vsel %vm53, %v57, 0.0
      %s59 = sadd.s32 %s45, 1
      %s60 = sld [smem:[#allocation2 + %s59]]
      %p61 = scmp.gt.s32.totalorder %s60, 0
      %s62 = scalar_select %p61, %s60, 0
      %p63 = scmp.lt.s32.totalorder %s62, 63
      %s64 = scalar_select %p63, %s62, 63
      %s65 = scalar_lea.vmem [#allocation6], %s64
      %v66 = vld [vmem:[%s65] sm:$0x1]
      %vm67 = vcmp.eq.s32.totalorder %v38, 1
      %v68 = vlaneseq
      %v69 = vshrl.u32 %v68, 7
      %v70 = vsub.s32 0, %v69
      %v71 = vrot.slane %v66, %v70
      %v72 = vsel %vm67, %v71, %v58
      %s73 = sadd.s32 %s45, 2
      %s74 = sld [smem:[#allocation2 + %s73]]
      %p75 = scmp.gt.s32.totalorder %s74, 0
      %s76 = scalar_select %p75, %s74, 0
      %p77 = scmp.lt.s32.totalorder %s76, 63
      %s78 = scalar_select %p77, %s76, 63
      %s79 = scalar_lea.vmem [#allocation6], %s78
      %v80 = vld [vmem:[%s79] sm:$0x1]
      %vm81 = vcmp.eq.s32.totalorder %v38, 2
      %v82 = vlaneseq
      %v83 = vshrl.u32 %v82, 7
      %v84 = vsub.s32 0, %v83
      %v85 = vrot.slane %v80, %v84
      %v86 = vsel %vm81, %v85, %v72
      %s87 = sadd.s32 %s45, 3
      %s88 = sld [smem:[#allocation2 + %s87]]
      %p89 = scmp.gt.s32.totalorder %s88, 0
      %s90 = scalar_select %p89, %s88, 0
      %p91 = scmp.lt.s32.totalorder %s90, 63
      %s92 = scalar_select %p91, %s90, 63
      %s93 = scalar_lea.vmem [#allocation6], %s92
      %v94 = vld [vmem:[%s93] sm:$0x1]
      %vm95 = vcmp.eq.s32.totalorder %v38, 3
      %v96 = vlaneseq
      %v97 = vshrl.u32 %v96, 7
      %v98 = vsub.s32 0, %v97
      %v99 = vrot.slane %v94, %v98
      %v100 = vsel %vm95, %v99, %v86
      %s101 = sadd.s32 %s45, 4
      %s102 = sld [smem:[#allocation2 + %s101]]
      %p103 = scmp.gt.s32.totalorder %s102, 0
      %s104 = scalar_select %p103, %s102, 0
      %p105 = scmp.lt.s32.totalorder %s104, 63
      %s106 = scalar_select %p105, %s104, 63
      %s107 = scalar_lea.vmem [#allocation6], %s106
      %v108 = vld [vmem:[%s107] sm:$0x1]
      %vm109 = vcmp.eq.s32.totalorder %v38, 4
      %v110 = vlaneseq
      %v111 = vshrl.u32 %v110, 7
      %v112 = vsub.s32 0, %v111
      %v113 = vrot.slane %v108, %v112
      %v114 = vsel %vm109, %v113, %v100
      %s115 = sadd.s32 %s45, 5
      %s116 = sld [smem:[#allocation2 + %s115]]
      %p117 = scmp.gt.s32.totalorder %s116, 0
      %s118 = scalar_select %p117, %s116, 0
      %p119 = scmp.lt.s32.totalorder %s118, 63
      %s120 = scalar_select %p119, %s118, 63
      %s121 = scalar_lea.vmem [#allocation6], %s120
      %v122 = vld [vmem:[%s121] sm:$0x1]
      %vm123 = vcmp.eq.s32.totalorder %v38, 5
      %v124 = vlaneseq
      %v125 = vshrl.u32 %v124, 7
      %v126 = vsub.s32 0, %v125
      %v127 = vrot.slane %v122, %v126
      %v128 = vsel %vm123, %v127, %v114
      %s129 = sadd.s32 %s45, 6
      %s130 = sld [smem:[#allocation2 + %s129]]
      %p131 = scmp.gt.s32.totalorder %s130, 0
      %s132 = scalar_select %p131, %s130, 0
      %p133 = scmp.lt.s32.totalorder %s132, 63
      %s134 = scalar_select %p133, %s132, 63
      %s135 = scalar_lea.vmem [#allocation6], %s134
      %v136 = vld [vmem:[%s135] sm:$0x1]
      %vm137 = vcmp.eq.s32.totalorder %v38, 6
      %v138 = vlaneseq
      %v139 = vshrl.u32 %v138, 7
      %v140 = vsub.s32 0, %v139
      %v141 = vrot.slane %v136, %v140
      %v142 = vsel %vm137, %v141, %v128
      %s143 = sadd.s32 %s45, 7
      %s144 = sld [smem:[#allocation2 + %s143]]
      %p145 = scmp.gt.s32.totalorder %s144, 0
      %s146 = scalar_select %p145, %s144, 0
      %p147 = scmp.lt.s32.totalorder %s146, 63
      %s148 = scalar_select %p147, %s146, 63
      %s149 = scalar_lea.vmem [#allocation6], %s148
      %v150 = vld [vmem:[%s149] sm:$0x1]
      %vm151 = vcmp.eq.s32.totalorder %v38, 7
      %v152 = vlaneseq
      %v153 = vshrl.u32 %v152, 7
      %v154 = vsub.s32 0, %v153
      %v155 = vrot.slane %v150, %v154
      %v156 = vsel %vm151, %v155, %v142
      %s157 = scalar_lea.vmem [#allocation7], %s45
      %158 = vst [vmem:[%s157] sm:$0xff] %v156
    $region22: #{tpu_custom_call.1} parent=1 // loop_footer
      %s44 = sadd.s32 1, %s40
    $region23: #{tpu_custom_call.1} parent=1 // loop_footer_branch
      %39 = sbr.rel target = $region19
    $region24: #{tpu_custom_call.1} parent=1 // loop_exit
      _
    // Predicated region
    $region25: #{tpu_custom_call.1} parent=1 // pred_check
      _
    $region26: #{tpu_custom_call.1} parent=1 // pred_check_branch
      %160 = sbr.rel (0) target = $region28
    $region27: #{tpu_custom_call.1} parent=1 // pred_region
      %s162 = ssub.s32 256, 256
      %163 = vsyncadd [#allocation4], %s162
      %s164 = sshll.u32 [#allocation7], 4
      %s165 = int_to_ptr.vmem [resolvable:$true] %s164
      %170 = dma.vmem_to_hbm [thread:$0]  %s165, 256, %s2, [#allocation4], 128, 128, 8
    $region28: #{tpu_custom_call.1} parent=1 // pred_fallthru
      _
    // Predicated region
    $region29: #{tpu_custom_call.1} parent=1 // pred_check
      _
    $region30: #{tpu_custom_call.1} parent=1 // pred_check_branch
      %172 = sbr.rel (0) target = $region32
    $region31: #{tpu_custom_call.1} parent=1 // pred_region
      %173 = dma.done [#allocation4], 256
    $region32: #{tpu_custom_call.1} parent=1 // pred_fallthru
      _
    %174 = vsyncpa [#allocation3], 1
    %175 = vsyncpa [#allocation4], 1
    %176 = vsyncpa [#allocation5], 1

</llo_original>
